<compile_context>
chip_gen: v6e
topology: v6e:2x2x1
jax: 0.10.0
libtpu: 0.0.40
codegen_flags: <defaults>
</compile_context>

<pallas_src>
import functools

import jax
import jax.numpy as jnp
from jax.experimental import pallas as pl
from jax.experimental.pallas import tpu as pltpu

_LANES = 128
_SUBLANES = 8
# 8192 rows * 128 lanes * 4 B = 4 MiB per f32 block; double-buffered in + out
# is ~16 MiB, covered by an explicit 32 MiB scoped-VMEM limit (safe on
# v5e/v6e/v7x — all have >= 64 MiB physical VMEM per TensorCore).
_MAX_TILE_ROWS = 8192
_VMEM_LIMIT_BYTES = 32 * 1024 * 1024


def _swish_kernel(x_ref, o_ref, *, beta):
    # beta is a static Python float folded into the VPU multiply (no SMEM arg).
    x = x_ref[...].astype(jnp.float32)
    z = beta * x
    # sigmoid(z) = 0.5 * (tanh(z/2) + 1): one EUP transcendental per element
    # (vs exp + reciprocal) and it saturates cleanly for large |z| (no inf).
    sig = 0.5 * (jnp.tanh(0.5 * z) + 1.0)
    o_ref[...] = (x * sig).astype(o_ref.dtype)


def _pick_tile_rows(rows):
    """Block rows: a multiple of 8, capped at _MAX_TILE_ROWS, chosen so the
    1-D grid has an even number (>= 2) of steps whenever rows > 8 — this lets
    v7x's two TensorCores both get work and stay balanced."""
    if rows <= _SUBLANES:
        return rows  # single tiny block; block dim == full array dim is legal
    steps = max(2, pl.cdiv(rows, _MAX_TILE_ROWS))
    if steps % 2:
        steps += 1  # even step count keeps the two TCs balanced
    tile = pl.cdiv(rows, steps)
    tile = ((tile + _SUBLANES - 1) // _SUBLANES) * _SUBLANES  # sublane-aligned
    return min(tile, _MAX_TILE_ROWS)


@functools.partial(jax.jit, static_argnames=("beta",))
def swish(x, beta=1.0):
    orig_shape = x.shape
    orig_dtype = x.dtype
    n = x.size

    # Lane-dense 2-D view.  For the common activation case (numel % 128 == 0,
    # e.g. the NCHW tensors in gnn_2d.py) this is a pure metadata reshape —
    # no pad / slice HBM round-trips.
    pad = (-n) % _LANES
    x_flat = jnp.reshape(x, (-1,))
    if pad:
        # TODO(synk): a <128-element tail epilogue would avoid the extra HBM
        # traffic of pad+slice; zero padding is still correct (swish(0) == 0).
        x_flat = jnp.pad(x_flat, (0, pad))
    rows = (n + pad) // _LANES
    x2d = jnp.reshape(x_flat, (rows, _LANES))

    tile_rows = _pick_tile_rows(rows)
    grid = (pl.cdiv(rows, tile_rows),)

    kernel = functools.partial(_swish_kernel, beta=float(beta))

    out2d = pl.pallas_call(
        kernel,
        out_shape=jax.ShapeDtypeStruct((rows, _LANES), orig_dtype),
        grid=grid,
        in_specs=[pl.BlockSpec((tile_rows, _LANES), lambda i: (i, 0))],
        out_specs=pl.BlockSpec((tile_rows, _LANES), lambda i: (i, 0)),
        compiler_params=pltpu.CompilerParams(
            dimension_semantics=("parallel",),  # shards grid across v7x's 2 TCs
            vmem_limit_bytes=_VMEM_LIMIT_BYTES,
        ),
    )(x2d)
    # NOTE: callers that can donate `x` may add input_output_aliases={0: 0} to
    # run the activation in place; it is left off here so a non-donated input
    # does not force XLA to insert a defensive copy.

    out_flat = jnp.reshape(out2d, (-1,))
    if pad:
        out_flat = out_flat[:n]
    return jnp.reshape(out_flat, orig_shape)


if __name__ == "__main__":
    key = jax.random.PRNGKey(0)
    # NCHW input, consistent with the conv-style usage in gnn_2d.py
    x = jax.random.normal(key, (2, 4, 16, 16), dtype=jnp.float32)

    beta = 1.0
    out = swish(x, beta=beta)
    out = jax.block_until_ready(out)

    # Reference check in plain JAX.
    ref = x * jax.nn.sigmoid(beta * x)
    assert out.shape == x.shape and out.dtype == x.dtype
    assert jnp.max(jnp.abs(out - ref)) < 1e-5

    print("KERNEL_OK")
</pallas_src>

<mosaic_0001>
module attributes {stable_mosaic.version = 11 : i64} {
  func.func @_swish_kernel(%arg0: i32, %arg1: memref<8x128xf32, #tpu.memory_space<vmem>>, %arg2: memref<8x128xf32, #tpu.memory_space<vmem>>) attributes {dimension_semantics = [#tpu.dimension_semantics<parallel>], iteration_bounds = array<i64: 2>, scalar_prefetch = 0 : i64, scratch_operands = 0 : i64, tpu.core_type = #tpu.core_type<tc>, window_params = [{transform_indices = @transform_0, window_bounds = array<i64: 8, 128>}, {transform_indices = @transform_1, window_bounds = array<i64: 8, 128>}]} {
    %c0 = arith.constant 0 : index
    %c0_0 = arith.constant 0 : index
    %0 = vector.load %arg1[%c0, %c0_0] : memref<8x128xf32, #tpu.memory_space<vmem>>, vector<8x128xf32>
    %cst = arith.constant 1.000000e+00 : f32
    %1 = vector.broadcast %cst : f32 to vector<8x128xf32>
    %2 = arith.mulf %1, %0 : vector<8x128xf32>
    %cst_1 = arith.constant 5.000000e-01 : f32
    %3 = vector.broadcast %cst_1 : f32 to vector<8x128xf32>
    %4 = arith.mulf %3, %2 : vector<8x128xf32>
    %5 = math.tanh %4 : vector<8x128xf32>
    %cst_2 = arith.constant 1.000000e+00 : f32
    %6 = vector.broadcast %cst_2 : f32 to vector<8x128xf32>
    %7 = arith.addf %5, %6 : vector<8x128xf32>
    %cst_3 = arith.constant 5.000000e-01 : f32
    %8 = vector.broadcast %cst_3 : f32 to vector<8x128xf32>
    %9 = arith.mulf %8, %7 : vector<8x128xf32>
    %10 = arith.mulf %0, %9 : vector<8x128xf32>
    %c0_4 = arith.constant 0 : index
    %c0_5 = arith.constant 0 : index
    %11 = vector.load %arg2[%c0_4, %c0_5] : memref<8x128xf32, #tpu.memory_space<vmem>>, vector<8x128xf32>
    tpu.vector_store %arg2[%c0_4, %c0_5], %10 {strides = array<i32>} : memref<8x128xf32, #tpu.memory_space<vmem>>, vector<8x128xf32>,
    return
  }
  func.func @transform_0(%arg0: i32) -> (i32, i32) {
    %c0_i32 = arith.constant 0 : i32
    %c0_i32_0 = arith.constant 0 : i32
    return %arg0, %c0_i32 : i32, i32
  }
  func.func @transform_1(%arg0: i32) -> (i32, i32) {
    %c0_i32 = arith.constant 0 : i32
    %c0_i32_0 = arith.constant 0 : i32
    return %arg0, %c0_i32 : i32, i32
  }
}

</mosaic_0001>

<llo_original>
// kernel: swish.1
$region0: #{swish.1}
  #allocation0 [shape = 'u32[]', space=smem, size = 0x4, offset = 0x4, fixed_abs, tag = 'smem constant byte address 0x4 - core index']
  #allocation1 [shape = 'u32[144,128]{1,0:T(1,128)}', space=vmem, size = 0x12000, scoped, tag = 'internal scratch']
  %s0 = inlined_call_operand.vmem [shape: f32[16,128], index: 0, kind: input, shape index: {}]
  %s1 = inlined_call_operand.vmem [shape: f32[16,128], index: 1, kind: output, shape index: {}]
  %s2 = sld [smem:[#allocation0]]
  $region37: #{swish.1} parent=0
    _
  %s4 = ssub.s32 1, %s2
  %s5 = scalar_select 0, %s4, %s2
  loop: start=0, step=1, limit=4
  $region2: #{swish.1} parent=0 // loop_pre_header
    _
  $region3: #{swish.1} parent=0 // loop_header
    %s7 = sphi 0, %s11
    %p8 = scmp.ge.s32.totalorder %s7, 4
    %s17 = sphi 0, %s19
    %s20 = sphi 0, %s17
    %s21 = sphi 0, %s20
    %s37 = sphi 0, %s21
    %s43 = sphi 0, %s45
    %s46 = sphi 0, %s43
    %s47 = sphi 0, %s46
    %s63 = sphi 0, %s47
  $region4: #{swish.1} parent=0 // loop_header_branch
    %10 = sbr.rel (%p8) target = $region8
  $region5: #{swish.1} parent=0 // loop_body
    %s12 = ssub.s32 %s7, 1
    %s13 = ssub.s32 %s7, 2
    %s14 = sadd.s32 %s7, 1
    %s15 = ssub.s32 %s7, %s14
    %p16 = scmp.eq.s32.totalorder %s15, 0
    %s18 = sadd.s32 %s17, 1
    %s19 = scalar_select %p16, %s17, %s18
    %p22 = pneg %p16
    %p23 = scmp.eq.s32.totalorder %s7, 1
    %p24 = por %p22, %p23
    %p25 = scmp.ne.s32.totalorder %s17, %s20
    %p26 = scmp.eq.s32.totalorder %s7, 0
    %p27 = por %p25, %p26
    %p28 = scmp.ne.s32.totalorder %s17, %s20
    %p29 = scmp.eq.s32.totalorder %s12, 1
    %p30 = por %p28, %p29
    %p31 = scmp.ne.s32.totalorder %s20, %s21
    %p32 = scmp.eq.s32.totalorder %s12, 0
    %p33 = por %p31, %p32
    %p34 = scmp.ne.s32.totalorder %s20, %s21
    %p35 = scmp.eq.s32.totalorder %s13, 1
    %p36 = por %p34, %p35
    %p38 = scmp.ne.s32.totalorder %s21, %s37
    %p39 = scmp.eq.s32.totalorder %s13, 0
    %p40 = por %p38, %p39
    %s41 = ssub.s32 %s7, %s14
    %p42 = scmp.eq.s32.totalorder %s41, 0
    %s44 = sadd.s32 %s43, 1
    %s45 = scalar_select %p42, %s43, %s44
    %p48 = pneg %p42
    %p49 = scmp.eq.s32.totalorder %s7, 1
    %p50 = por %p48, %p49
    %p51 = scmp.ne.s32.totalorder %s43, %s46
    %p52 = scmp.eq.s32.totalorder %s7, 0
    %p53 = por %p51, %p52
    %p54 = scmp.ne.s32.totalorder %s43, %s46
    %p55 = scmp.eq.s32.totalorder %s12, 1
    %p56 = por %p54, %p55
    %p57 = scmp.ne.s32.totalorder %s46, %s47
    %p58 = scmp.eq.s32.totalorder %s12, 0
    %p59 = por %p57, %p58
    %p60 = scmp.ne.s32.totalorder %s46, %s47
    %p61 = scmp.eq.s32.totalorder %s13, 1
    %p62 = por %p60, %p61
    %p64 = scmp.ne.s32.totalorder %s47, %s63
    %p65 = scmp.eq.s32.totalorder %s13, 0
    %p66 = por %p64, %p65
    %p67 = scmp.le.s32.totalorder 1, %s7
    %p68 = scmp.lt.s32.totalorder %s7, 3
    %p69 = pnand %p67, %p68
    %p70 = pneg %p69
    // Predicated region
    $region9: #{swish.1} parent=5 // pred_check
      _
    $region10: #{swish.1} parent=5 // pred_check_branch
      %72 = sbr.rel (%p69) target = $region12
    $region11: #{swish.1} parent=5 // pred_region
      %s73 = ssub.s32 %s7, 1
    $region12: #{swish.1} parent=5 // pred_fallthru
      _
    %p74 = scmp.lt.s32.totalorder %s7, 2
    // Predicated region
    $region13: #{swish.1} parent=5 // pred_check
      %p75 = pneg %p74
    $region14: #{swish.1} parent=5 // pred_check_branch
      %77 = sbr.rel (%p75) target = $region16
    $region15: #{swish.1} parent=5 // pred_region
      // Predicated region
      $region17: #{swish.1} parent=15 // pred_check
        %p78 = pneg %p27
      $region18: #{swish.1} parent=15 // pred_check_branch
        %80 = sbr.rel (%p78) target = $region20
      $region19: #{swish.1} parent=15 // pred_region
        %p81 = scmp.lt.s32.totalorder %s7, 1
        %s82 = scalar_select %p81, %s7, 1
        %s83 = smul.addr %s82, 8
        %s84 = scalar_lea.vmem %s0, %s83
      $region20: #{swish.1} parent=15 // pred_fallthru
        _
    $region16: #{swish.1} parent=5 // pred_fallthru
      _
    %p85 = scmp.le.s32.totalorder 1, %s7
    %p86 = scmp.lt.s32.totalorder %s7, 3
    %p87 = pnand %p85, %p86
    %p88 = pneg %p87
    // Predicated region
    $region21: #{swish.1} parent=5 // pred_check
      _
    $region22: #{swish.1} parent=5 // pred_check_branch
      %90 = sbr.rel (%p87) target = $region24
    $region23: #{swish.1} parent=5 // pred_region
      %s91 = ssub.s32 %s7, 1
      %p92 = scmp.lt.s32.totalorder %s12, 1
      %s93 = scalar_select %p92, %s12, 1
      %s94 = smul.addr %s93, 8
      %s95 = scalar_lea.vmem %s0, %s94
      %p96 = pneg %p33
      %p97 = pneg %p30
      %p98 = pneg %p59
      %p99 = pneg %p56
      %p100 = scmp.lt.s32.totalorder %s12, 1
      %s101 = scalar_select %p100, %s12, 1
      %s102 = smul.addr %s101, 8
      %s103 = scalar_lea.vmem %s1, %s102
      %p104 = scmp.lt.s32.totalorder %s12, 1
      %s105 = scalar_select %p104, %s12, 1
      %s106 = smul.addr %s105, 8
      %s107 = scalar_lea.vmem %s0, %s106
      %p108 = scmp.lt.s32.totalorder %s12, 1
      %s109 = scalar_select %p108, %s12, 1
      %s110 = smul.addr %s109, 8
      %s111 = scalar_lea.vmem %s1, %s110
      %v112 = vld [vmem:[%s107] sm:$0xff]
      %v113 = vmul.f32 %v112, 0.5
      %v114 = vtanh.pop %v113
      %v115 = vadd.f32 %v114, 1.0
      %v116 = vmul.f32 %v115, 0.5
      %v117 = vmul.f32 %v112, %v116
      %118 = vst [vmem:[%s111] sm:$0xff] %v117
      %p119 = scmp.lt.s32.totalorder %s12, 1
      %s120 = scalar_select %p119, %s12, 1
      %s121 = smul.addr %s120, 8
      %s122 = scalar_lea.vmem %s1, %s121
      // Predicated region
      $region25: #{swish.1} parent=23 // pred_check
        %p123 = pneg %p56
      $region26: #{swish.1} parent=23 // pred_check_branch
        %125 = sbr.rel (%p123) target = $region28
      $region27: #{swish.1} parent=23 // pred_region
        _
      $region28: #{swish.1} parent=23 // pred_fallthru
        _
    $region24: #{swish.1} parent=5 // pred_fallthru
      _
    %p126 = scmp.le.s32.totalorder 2, %s7
    // Predicated region
    $region29: #{swish.1} parent=5 // pred_check
      %p127 = pneg %p126
    $region30: #{swish.1} parent=5 // pred_check_branch
      %129 = sbr.rel (%p127) target = $region32
    $region31: #{swish.1} parent=5 // pred_region
      %s130 = ssub.s32 %s7, 2
      // Predicated region
      $region33: #{swish.1} parent=31 // pred_check
        %p131 = pneg %p62
      $region34: #{swish.1} parent=31 // pred_check_branch
        %133 = sbr.rel (%p131) target = $region36
      $region35: #{swish.1} parent=31 // pred_region
        %p134 = scmp.lt.s32.totalorder %s13, 1
        %s135 = scalar_select %p134, %s13, 1
        %s136 = smul.addr %s135, 8
        %s137 = scalar_lea.vmem %s1, %s136
      $region36: #{swish.1} parent=31 // pred_fallthru
        _
    $region32: #{swish.1} parent=5 // pred_fallthru
      _
  $region6: #{swish.1} parent=0 // loop_footer
    %s11 = sadd.s32 1, %s7
  $region7: #{swish.1} parent=0 // loop_footer_branch
    %6 = sbr.rel target = $region3
  $region8: #{swish.1} parent=0 // loop_exit
    _

</llo_original>
